<compile_context>
chip_gen: v6e
topology: v6e:2x2x1
jax: 0.10.0
libtpu: 0.0.40
codegen_flags: <defaults>
</compile_context>

<pallas_src>
import functools

import jax
import jax.numpy as jnp
from jax.experimental import pallas as pl
from jax.experimental.pallas import tpu as pltpu  # noqa: F401  (TPU backend)


def ska_forward_kernel(x_ref, w_ref, b_ref, d_ref, z_ref):
    # z = x @ W + b   (f32 accumulation on the MXU; N dim is lane-dense = 128)
    z = jnp.dot(x_ref[...], w_ref[...], preferred_element_type=jnp.float32)
    z = z + b_ref[...]                      # (Bp, OUTp) + (1, OUTp) broadcast
    z_ref[...] = z
    # sigmoid(z) == 0.5 * (tanh(z/2) + 1): tanh goes to the EUP slot (no VPU divide)
    d_ref[...] = 0.5 * (jnp.tanh(0.5 * z) + 1.0)


@jax.jit
def ska_forward(x_flat, weight, bias):
    """One SKA forward step. Returns (D, z, frobenius_norm_of_z) as device arrays."""
    B, IN = x_flat.shape
    OUT = weight.shape[1]
    # Pad batch to a sublane multiple (8) and OUT to a lane multiple (128) so the
    # output stores are unmasked, full-lane vst. Zero padding keeps the math exact.
    B_pad = ((B + 7) // 8) * 8
    OUT_pad = ((OUT + 127) // 128) * 128

    xp = jnp.zeros((B_pad, IN), jnp.float32).at[:B, :].set(x_flat.astype(jnp.float32))
    wp = jnp.zeros((IN, OUT_pad), jnp.float32).at[:, :OUT].set(weight.astype(jnp.float32))
    bp = jnp.zeros((1, OUT_pad), jnp.float32).at[0, :OUT].set(bias.astype(jnp.float32))

    d_pad, z_pad = pl.pallas_call(
        ska_forward_kernel,
        out_shape=(
            jax.ShapeDtypeStruct((B_pad, OUT_pad), jnp.float32),
            jax.ShapeDtypeStruct((B_pad, OUT_pad), jnp.float32),
        ),
        grid=(1,),
        in_specs=[
            pl.BlockSpec((B_pad, IN), lambda i: (0, 0)),
            pl.BlockSpec((IN, OUT_pad), lambda i: (0, 0)),
            pl.BlockSpec((1, OUT_pad), lambda i: (0, 0)),
        ],
        out_specs=(
            pl.BlockSpec((B_pad, OUT_pad), lambda i: (0, 0)),
            pl.BlockSpec((B_pad, OUT_pad), lambda i: (0, 0)),
        ),
    )(xp, wp, bp)

    z = z_pad[:B, :OUT]
    d = d_pad[:B, :OUT]
    # Frobenius norm of the real (unpadded) z, fused into the same jitted program.
    norm = jnp.sqrt(jnp.sum(z * z))
    return d, z, norm


class PureSKAGeneratorPallas:
    """JAX/Pallas mirror of the PyTorch PureSKAGenerator forward path."""

    def __init__(self, input_size=64, layer_size=16, K=50, eta=0.01, key=None):
        self.input_size = input_size
        self.layer_size = layer_size
        self.K = K
        self.eta = eta
        if key is None:
            key = jax.random.PRNGKey(0)
        # torch.randn(input_size, layer_size) * 0.01 analogue (deterministic)
        self.weight = jax.random.normal(
            key, (input_size, layer_size), dtype=jnp.float32) * 0.01
        self.bias = jnp.zeros((layer_size,), dtype=jnp.float32)
        self.reset_for_new_digit()

    def reset_for_new_digit(self):
        self.z_history = []
        self.D_history = []
        self.frobenius_evolution = []   # device scalars (no per-step host sync)

    def forward(self, x):
        batch_size = x.shape[0]
        x_flat = x.reshape(batch_size, -1)          # x.view(B, -1)
        D, z, z_norm = ska_forward(x_flat, self.weight, self.bias)
        self.z_history.append(z)
        self.D_history.append(D)
        # Keep as a device array: converting to float() here would force a
        # device->host sync every step and dominate wall clock for K=50.
        self.frobenius_evolution.append(z_norm)
        return D

    def frobenius_values(self):
        """One host readback at the end of the K-step loop."""
        if not self.frobenius_evolution:
            return []
        stacked = jax.device_get(jnp.stack(self.frobenius_evolution))
        return [float(v) for v in stacked]


if __name__ == "__main__":
    key = jax.random.PRNGKey(0)
    k_w, k_x = jax.random.split(key)

    B, H, W = 8, 8, 8                 # x is (B, 8, 8) -> flattened to (B, 64)
    input_size = H * W
    layer_size = 16

    gen = PureSKAGeneratorPallas(input_size=input_size, layer_size=layer_size,
                                 K=50, eta=0.01, key=k_w)

    x = jax.random.normal(k_x, (B, H, W), dtype=jnp.float32)

    D = gen.forward(x)
    D = jax.block_until_ready(D)

    # Pure-JAX reference for correctness check.
    x_flat = x.reshape(B, -1)
    z_ref = x_flat @ gen.weight + gen.bias
    D_ref = jax.nn.sigmoid(z_ref)
    norm_ref = jnp.sqrt(jnp.sum(z_ref * z_ref))

    assert D.shape == (B, layer_size), "D shape mismatch"
    assert jnp.allclose(D, D_ref, atol=1e-5, rtol=1e-5), "D mismatch"
    assert jnp.allclose(gen.z_history[-1], z_ref, atol=1e-5, rtol=1e-5), "z mismatch"
    norms = gen.frobenius_values()          # single host readback at the end
    assert abs(norms[-1] - float(norm_ref)) < 1e-4, "norm mismatch"

    print("KERNEL_OK")
</pallas_src>

<mosaic_0001>
module attributes {stable_mosaic.version = 11 : i64} {
  func.func @ska_forward_kernel(%arg0: i32, %arg1: memref<8x64xf32, #tpu.memory_space<vmem>>, %arg2: memref<64x128xf32, #tpu.memory_space<vmem>>, %arg3: memref<1x128xf32, #tpu.memory_space<vmem>>, %arg4: memref<8x128xf32, #tpu.memory_space<vmem>>, %arg5: memref<8x128xf32, #tpu.memory_space<vmem>>) attributes {dimension_semantics = [#tpu.dimension_semantics<arbitrary>], iteration_bounds = array<i64: 1>, scalar_prefetch = 0 : i64, scratch_operands = 0 : i64, tpu.core_type = #tpu.core_type<tc>, window_params = [{pipeline_mode = #tpu.pipeline_mode<synchronous>, transform_indices = @transform_0, window_bounds = array<i64: 8, 64>}, {pipeline_mode = #tpu.pipeline_mode<synchronous>, transform_indices = @transform_1, window_bounds = array<i64: 64, 128>}, {pipeline_mode = #tpu.pipeline_mode<synchronous>, transform_indices = @transform_2, window_bounds = array<i64: 1, 128>}, {pipeline_mode = #tpu.pipeline_mode<synchronous>, transform_indices = @transform_3, window_bounds = array<i64: 8, 128>}, {pipeline_mode = #tpu.pipeline_mode<synchronous>, transform_indices = @transform_4, window_bounds = array<i64: 8, 128>}]} {
    %c0 = arith.constant 0 : index
    %c0_0 = arith.constant 0 : index
    %0 = vector.load %arg1[%c0, %c0_0] : memref<8x64xf32, #tpu.memory_space<vmem>>, vector<8x64xf32>
    %c0_1 = arith.constant 0 : index
    %c0_2 = arith.constant 0 : index
    %1 = vector.load %arg2[%c0_1, %c0_2] : memref<64x128xf32, #tpu.memory_space<vmem>>, vector<64x128xf32>
    %cst = arith.constant dense<0.000000e+00> : vector<8x128xf32>
    %2 = tpu.matmul %0, %1, %cst {dimension_numbers = #tpu.dot_dimension_numbers<[1], [0], [0], [1], [0, 0, 1, 1], [], []>} : vector<8x64xf32>, vector<64x128xf32>, vector<8x128xf32> -> vector<8x128xf32>
    %c0_3 = arith.constant 0 : index
    %c0_4 = arith.constant 0 : index
    %3 = vector.load %arg3[%c0_3, %c0_4] : memref<1x128xf32, #tpu.memory_space<vmem>>, vector<1x128xf32>
    %4 = vector.broadcast %3 : vector<1x128xf32> to vector<8x128xf32>
    %5 = arith.addf %2, %4 : vector<8x128xf32>
    %c0_5 = arith.constant 0 : index
    %c0_6 = arith.constant 0 : index
    %6 = vector.load %arg5[%c0_5, %c0_6] : memref<8x128xf32, #tpu.memory_space<vmem>>, vector<8x128xf32>
    tpu.vector_store %arg5[%c0_5, %c0_6], %5 {strides = array<i32>} : memref<8x128xf32, #tpu.memory_space<vmem>>, vector<8x128xf32>,
    %cst_7 = arith.constant 5.000000e-01 : f32
    %7 = vector.broadcast %cst_7 : f32 to vector<8x128xf32>
    %8 = arith.mulf %7, %5 : vector<8x128xf32>
    %9 = math.tanh %8 : vector<8x128xf32>
    %cst_8 = arith.constant 1.000000e+00 : f32
    %10 = vector.broadcast %cst_8 : f32 to vector<8x128xf32>
    %11 = arith.addf %9, %10 : vector<8x128xf32>
    %cst_9 = arith.constant 5.000000e-01 : f32
    %12 = vector.broadcast %cst_9 : f32 to vector<8x128xf32>
    %13 = arith.mulf %12, %11 : vector<8x128xf32>
    %c0_10 = arith.constant 0 : index
    %c0_11 = arith.constant 0 : index
    %14 = vector.load %arg4[%c0_10, %c0_11] : memref<8x128xf32, #tpu.memory_space<vmem>>, vector<8x128xf32>
    tpu.vector_store %arg4[%c0_10, %c0_11], %13 {strides = array<i32>} : memref<8x128xf32, #tpu.memory_space<vmem>>, vector<8x128xf32>,
    return
  }
  func.func @transform_0(%arg0: i32) -> (i32, i32) {
    %c0_i32 = arith.constant 0 : i32
    %c0_i32_0 = arith.constant 0 : i32
    %c0_i32_1 = arith.constant 0 : i32
    return %c0_i32, %c0_i32_0 : i32, i32
  }
  func.func @transform_1(%arg0: i32) -> (i32, i32) {
    %c0_i32 = arith.constant 0 : i32
    %c0_i32_0 = arith.constant 0 : i32
    %c0_i32_1 = arith.constant 0 : i32
    return %c0_i32, %c0_i32_0 : i32, i32
  }
  func.func @transform_2(%arg0: i32) -> (i32, i32) {
    %c0_i32 = arith.constant 0 : i32
    %c0_i32_0 = arith.constant 0 : i32
    %c0_i32_1 = arith.constant 0 : i32
    return %c0_i32, %c0_i32_0 : i32, i32
  }
  func.func @transform_3(%arg0: i32) -> (i32, i32) {
    %c0_i32 = arith.constant 0 : i32
    %c0_i32_0 = arith.constant 0 : i32
    %c0_i32_1 = arith.constant 0 : i32
    return %c0_i32, %c0_i32_0 : i32, i32
  }
  func.func @transform_4(%arg0: i32) -> (i32, i32) {
    %c0_i32 = arith.constant 0 : i32
    %c0_i32_0 = arith.constant 0 : i32
    %c0_i32_1 = arith.constant 0 : i32
    return %c0_i32, %c0_i32_0 : i32, i32
  }
}

</mosaic_0001>

<llo_original>
// kernel: ska_forward.1
$region0: #{ska_forward.1}
  #allocation0 [shape = 'u32[]', space=smem, size = 0x4, offset = 0x4, fixed_abs, tag = 'smem constant byte address 0x4 - core index']
  #allocation1 [shape = 'u32[144,128]{1,0:T(1,128)}', space=vmem, size = 0x12000, scoped, tag = 'internal scratch']
  %s0 = inlined_call_operand.vmem [shape: f32[8,64], index: 0, kind: input, shape index: {}]
  %s1 = inlined_call_operand.vmem [shape: f32[64,128], index: 1, kind: input, shape index: {}]
  %s2 = inlined_call_operand.vmem [shape: f32[1,128], index: 2, kind: input, shape index: {}]
  %s3 = inlined_call_operand.hbm [shape: f32[8,128], index: 3, kind: output, shape index: {0}]
  %s4 = inlined_call_operand.vmem [shape: f32[8,128], index: 4, kind: output, shape index: {1}]
  %5 = xla_tuple %s3, %s4
  %s6 = sld [smem:[#allocation0]]
  $region30: #{ska_forward.1} parent=0
    _
  %s8 = ssub.s32 1, %s6
  %s9 = scalar_select 0, %s8, %s6
  $region1: #{ska_forward.1} parent=0
    #allocation2 [shape = 'u8[4096]{0}', space=vmem, size = 0x1000, scoped, tag = 'output window, operand 0, single buffered']
    #allocation3 [shape = 's32[1]{0}', space=sflag, size = 0x4, scoped, tag = 'scoped memory for ska_forward.1']
    %10 = vsyncpa [#allocation3], 0
    // Predicated region
    $region2: #{ska_forward.1} parent=1 // pred_check
      _
    $region3: #{ska_forward.1} parent=1 // pred_check_branch
      %12 = sbr.rel (0) target = $region5
    $region4: #{ska_forward.1} parent=1 // pred_region
      _
    $region5: #{ska_forward.1} parent=1 // pred_fallthru
      _
    // Predicated region
    $region6: #{ska_forward.1} parent=1 // pred_check
      _
    $region7: #{ska_forward.1} parent=1 // pred_check_branch
      %14 = sbr.rel (0) target = $region9
    $region8: #{ska_forward.1} parent=1 // pred_region
      _
    $region9: #{ska_forward.1} parent=1 // pred_fallthru
      _
    // Predicated region
    $region10: #{ska_forward.1} parent=1 // pred_check
      _
    $region11: #{ska_forward.1} parent=1 // pred_check_branch
      %16 = sbr.rel (0) target = $region13
    $region12: #{ska_forward.1} parent=1 // pred_region
      _
    $region13: #{ska_forward.1} parent=1 // pred_fallthru
      _
    %v17 = vld [vmem:[%s0] sm:$0xff]
    %v18 = vld [vmem:[%s1] sm:$0xff]
    %v19 = vld [vmem:[%s1 + $0x8] sm:$0xff]
    %v20 = vld [vmem:[%s1 + $0x10] sm:$0xff]
    %v21 = vld [vmem:[%s1 + $0x18] sm:$0xff]
    %v22 = vld [vmem:[%s1 + $0x20] sm:$0xff]
    %v23 = vld [vmem:[%s1 + $0x28] sm:$0xff]
    %v24 = vld [vmem:[%s1 + $0x30] sm:$0xff]
    %v25 = vld [vmem:[%s1 + $0x38] sm:$0xff]
    %v26 = vld [vmem:[%s2] sm:$0x1]
    %v28 = vlaneseq
    %v29 = vshrl.u32 %v28, 7
    %v30 = vsub.s32 0, %v29
    %v31 = vrot.slane %v26, %v30
    %vm33 = vcmask 523264
    %v35 = vsel %vm33, %v17, 0
    %37 = vmatprep.subr.mxu0 0.0
    %38 = vmatpush1.msra.mxu0 0.0
    %39 = vmatprep.subr.mxu0 0.0
    %40 = vmatpush1.msra.mxu0 0.0
    %41 = vmatprep.subr.mxu0 0.0
    %42 = vmatpush1.msra.mxu0 0.0
    %43 = vmatprep.subr.mxu0 0.0
    %44 = vmatpush1.msra.mxu0 0.0
    %45 = vmatprep.subr.mxu0 0.0
    %46 = vmatpush1.msra.mxu0 0.0
    %47 = vmatprep.subr.mxu0 0.0
    %48 = vmatpush1.msra.mxu0 0.0
    %49 = vmatprep.subr.mxu0 0.0
    %50 = vmatpush1.msra.mxu0 0.0
    %51 = vmatprep.subr.mxu0 0.0
    %52 = vmatpush1.msra.mxu0 0.0
    %53 = vmatprep.subr.mxu0 0.0
    %54 = vmatpush1.msra.mxu0 %v25
    %55 = vmatprep.subr.mxu0 0.0
    %56 = vmatpush1.msra.mxu0 %v24
    %57 = vmatprep.subr.mxu0 0.0
    %58 = vmatpush1.msra.mxu0 %v23
    %59 = vmatprep.subr.mxu0 0.0
    %60 = vmatpush1.msra.mxu0 %v22
    %61 = vmatprep.subr.mxu0 0.0
    %62 = vmatpush1.msra.mxu0 %v21
    %63 = vmatprep.subr.mxu0 0.0
    %64 = vmatpush1.msra.mxu0 %v20
    %65 = vmatprep.subr.mxu0 0.0
    %66 = vmatpush1.msra.mxu0 %v19
    %67 = vmatprep.subr.mxu0 0.0
    %68 = vmatpush1.msra.mxu0 %v18
    %69 = vmatprep.subr.mxu0 0.0
    %70 = vmatpush2.msra.mxu0 0.0
    %71 = vmatprep.subr.mxu0 0.0
    %72 = vmatpush2.msra.mxu0 0.0
    %73 = vmatprep.subr.mxu0 0.0
    %74 = vmatpush2.msra.mxu0 0.0
    %75 = vmatprep.subr.mxu0 0.0
    %76 = vmatpush2.msra.mxu0 0.0
    %77 = vmatprep.subr.mxu0 0.0
    %78 = vmatpush2.msra.mxu0 0.0
    %79 = vmatprep.subr.mxu0 0.0
    %80 = vmatpush2.msra.mxu0 0.0
    %81 = vmatprep.subr.mxu0 0.0
    %82 = vmatpush2.msra.mxu0 0.0
    %83 = vmatprep.subr.mxu0 0.0
    %84 = vmatpush2.msra.mxu0 0.0
    %85 = vmatprep.subr.mxu0 0.0
    %86 = vmatpush2.msra.mxu0 0.0
    %87 = vmatprep.subr.mxu0 0.0
    %88 = vmatpush2.msra.mxu0 0.0
    %89 = vmatprep.subr.mxu0 0.0
    %90 = vmatpush2.msra.mxu0 0.0
    %91 = vmatprep.subr.mxu0 0.0
    %92 = vmatpush2.msra.mxu0 0.0
    %93 = vmatprep.subr.mxu0 0.0
    %94 = vmatpush2.msra.mxu0 0.0
    %95 = vmatprep.subr.mxu0 0.0
    %96 = vmatpush2.msra.mxu0 0.0
    %97 = vmatprep.subr.mxu0 0.0
    %98 = vmatpush2.msra.mxu0 0.0
    %99 = vmatprep.subr.mxu0 0.0
    %100 = vmatpush2.msra.mxu0 0.0
    %101 = vmatprep.mubr.f32.mxu0 0.0
    %102 = vmatmul.mubr.f32.gmra.mxu0 %v35
    %v103 = vpop.f32.mrf.mxu0
    %v104 = vadd.f32 %v31, %v103
    %v105 = vpop.f32.mrf.mxu0
    %106 = vdwg.mxu0
    %107 = vst [vmem:[%s4] sm:$0xff] %v104
    %v108 = vmul.f32 %v104, 0.5
    %v109 = vtanh.pop %v108
    %v110 = vadd.f32 %v109, 1.0
    %v111 = vmul.f32 %v110, 0.5
    %112 = vst [vmem:[#allocation2] sm:$0xff] %v111
    // Predicated region
    $region14: #{ska_forward.1} parent=1 // pred_check
      _
    $region15: #{ska_forward.1} parent=1 // pred_check_branch
      %114 = sbr.rel (0) target = $region17
    $region16: #{ska_forward.1} parent=1 // pred_region
      %s116 = ssub.s32 128, 128
      %117 = vsyncadd [#allocation3], %s116
      %s119 = sshll.u32 [#allocation2], 4
      %s120 = int_to_ptr.vmem [resolvable:$true] %s119
      %122 = dma.vmem_to_hbm [thread:$0]  %s120, 128, %s3, [#allocation3]
    $region17: #{ska_forward.1} parent=1 // pred_fallthru
      _
    // Predicated region
    $region18: #{ska_forward.1} parent=1 // pred_check
      _
    $region19: #{ska_forward.1} parent=1 // pred_check_branch
      %124 = sbr.rel (0) target = $region21
    $region20: #{ska_forward.1} parent=1 // pred_region
      _
    $region21: #{ska_forward.1} parent=1 // pred_fallthru
      _
    // Predicated region
    $region22: #{ska_forward.1} parent=1 // pred_check
      _
    $region23: #{ska_forward.1} parent=1 // pred_check_branch
      %126 = sbr.rel (0) target = $region25
    $region24: #{ska_forward.1} parent=1 // pred_region
      %127 = dma.done [#allocation3], 128
    $region25: #{ska_forward.1} parent=1 // pred_fallthru
      _
    // Predicated region
    $region26: #{ska_forward.1} parent=1 // pred_check
      _
    $region27: #{ska_forward.1} parent=1 // pred_check_branch
      %129 = sbr.rel (0) target = $region29
    $region28: #{ska_forward.1} parent=1 // pred_region
      _
    $region29: #{ska_forward.1} parent=1 // pred_fallthru
      _
    %130 = vsyncpa [#allocation3], 1

</llo_original>
